<compile_context>
chip_gen: v7x
topology: tpu7x:2x2x1
jax: 0.10.0
libtpu: 0.0.40
codegen_flags: <defaults>
</compile_context>

<pallas_src>
import functools

import jax
import jax.numpy as jnp
import numpy as np
from jax import lax
from jax.experimental import pallas as pl
from jax.experimental.pallas import tpu as pltpu

EPS = 1e-5
LANE = 128                     # TPU lane width: channel / K dims padded to this.
MAX_ROW_TILE = 512             # M (sublane) tile cap.
MAX_N_TILE = 512               # output-channel (lane) tile cap.
MAX_K_TILE = 512               # contraction tile cap.
VMEM_LIMIT = 32 * 1024 * 1024  # explicit scoped-VMEM budget; safe on v5e/v6e/v7x.


def _round_up(x, m):
    return (x + m - 1) // m * m


def _row_tile(m):
    """Row (sublane) tile size: multiple of 8, capped at MAX_ROW_TILE."""
    return min(MAX_ROW_TILE, _round_up(m, 8))


def _pick_tile(dim_pad, cap):
    """Largest multiple of 128 that divides dim_pad and is <= cap."""
    t = min(cap, dim_pad)
    while dim_pad % t:
        t -= LANE
    return t


# ---------------- tiled matmul (MXU) with fused BatchNorm partial stats ----------------
def _matmul_bn_kernel(a_ref, b_ref, o_ref, sum_ref, sq_ref, acc_ref):
    @pl.when(pl.program_id(2) == 0)
    def _init():
        acc_ref[...] = jnp.zeros_like(acc_ref)

    acc_ref[...] += jnp.dot(a_ref[...], b_ref[...],
                            preferred_element_type=jnp.float32)

    @pl.when(pl.program_id(2) == pl.num_programs(2) - 1)
    def _done():
        acc = acc_ref[...]
        o_ref[...] = acc.astype(o_ref.dtype)        # bf16 writeback (half HBM traffic)
        # Per-(row-tile, col-tile) partial BN statistics from the f32 accumulator.
        # Zero-padded A rows / B columns contribute exactly zero, so dividing by the
        # real row count outside stays correct.
        sum_ref[...] = jnp.reshape(jnp.sum(acc, axis=0, keepdims=True), sum_ref.shape)
        sq_ref[...] = jnp.reshape(jnp.sum(acc * acc, axis=0, keepdims=True), sq_ref.shape)


def pallas_matmul_bn(a, b):
    """a:(M,K), b:(K,N), both cast to bf16 for the MXU; accumulation is f32.

    Returns:
      out  : (M_pad, N_pad) bf16 product (zero-padded rows/cols),
      psum : (M_pad//tm, 1, N_pad) f32 per-row-tile column sums of the f32 accumulator,
      psq  : same shape, column sums of squares (for fused BatchNorm statistics).
    """
    M, K = a.shape
    K2, N = b.shape
    assert K == K2
    tm = _row_tile(M)
    m_pad = _round_up(M, tm)
    k_pad = _round_up(K, LANE)
    n_pad = _round_up(N, LANE)
    tk = _pick_tile(k_pad, MAX_K_TILE)
    tn = _pick_tile(n_pad, MAX_N_TILE)
    n_i = m_pad // tm

    # Operands arrive in bf16 already; the pad fuses into the producer (im2col) fusion.
    a_p = jnp.pad(a.astype(jnp.bfloat16), ((0, m_pad - M), (0, k_pad - K)))
    b_p = jnp.pad(b.astype(jnp.bfloat16), ((0, k_pad - K), (0, n_pad - N)))

    grid = (n_i, n_pad // tn, k_pad // tk)
    out, psum, psq = pl.pallas_call(
        _matmul_bn_kernel,
        out_shape=(jax.ShapeDtypeStruct((m_pad, n_pad), jnp.bfloat16),
                   jax.ShapeDtypeStruct((n_i, 1, n_pad), jnp.float32),
                   jax.ShapeDtypeStruct((n_i, 1, n_pad), jnp.float32)),
        grid=grid,
        in_specs=[
            pl.BlockSpec((tm, tk), lambda i, j, k: (i, k)),
            pl.BlockSpec((tk, tn), lambda i, j, k: (k, j)),
        ],
        out_specs=(
            pl.BlockSpec((tm, tn), lambda i, j, k: (i, j)),
            pl.BlockSpec((1, 1, tn), lambda i, j, k: (i, 0, j)),
            pl.BlockSpec((1, 1, tn), lambda i, j, k: (i, 0, j)),
        ),
        scratch_shapes=[pltpu.VMEM((tm, tn), jnp.float32)],
        compiler_params=pltpu.CompilerParams(
            dimension_semantics=("parallel", "parallel", "arbitrary"),
            vmem_limit_bytes=VMEM_LIMIT),
        cost_estimate=pl.CostEstimate(
            flops=2 * m_pad * n_pad * k_pad,
            transcendentals=0,
            bytes_accessed=(m_pad * k_pad + k_pad * n_pad + m_pad * n_pad) * 2
                           + 2 * n_i * n_pad * 4),
    )(a_p, b_p)
    return out, psum, psq


# ------------------- BatchNorm scale/shift (tiny, once per conv) -------------------
def bn_scale_shift(psum, psq, gamma, beta, m_real):
    """Fold partial stats into per-channel scale/shift (PyTorch train-mode BN)."""
    c_pad = psum.shape[-1]
    s = jnp.sum(psum, axis=0)                      # (1, c_pad)
    q = jnp.sum(psq, axis=0)
    inv_m = 1.0 / float(m_real)
    mean = s * inv_m
    var = q * inv_m - mean * mean                  # biased variance
    g = jnp.pad(gamma.astype(jnp.float32), ((0, 0), (0, c_pad - gamma.shape[1])))
    b = jnp.pad(beta.astype(jnp.float32), ((0, 0), (0, c_pad - beta.shape[1])))
    scale = g * lax.rsqrt(var + EPS)
    shift = b - mean * scale
    return scale, shift                            # each (1, c_pad) f32


# --------------- normalize (+ residual) (+ ReLU), tiled & streaming ---------------
def _bn_apply_kernel(x_ref, scale_ref, shift_ref, *rest, relu, has_res):
    if has_res:
        res_ref, o_ref = rest
    else:
        (o_ref,) = rest
    y = x_ref[...].astype(jnp.float32) * scale_ref[...] + shift_ref[...]
    if has_res:
        y = y + res_ref[...].astype(jnp.float32)
    if relu:
        y = jnp.maximum(y, 0.0)
    # NOTE: padded rows (m >= m_real) hold `shift` values; callers must slice [:M, :Cout].
    o_ref[...] = y.astype(o_ref.dtype)


def pallas_bn_apply(x, scale, shift, *, relu, residual=None, out_dtype=jnp.bfloat16):
    """y = x*scale + shift (+ residual) (relu), tiled over rows; x is (M_pad, C_pad)."""
    m_pad, c_pad = x.shape
    tm = _row_tile(m_pad)
    assert m_pad % tm == 0
    kern = functools.partial(_bn_apply_kernel, relu=relu, has_res=residual is not None)
    in_specs = [
        pl.BlockSpec((tm, c_pad), lambda i: (i, 0)),
        pl.BlockSpec((1, c_pad), lambda i: (0, 0)),
        pl.BlockSpec((1, c_pad), lambda i: (0, 0)),
    ]
    args = [x, scale, shift]
    if residual is not None:
        in_specs.append(pl.BlockSpec((tm, c_pad), lambda i: (i, 0)))
        args.append(residual)
    return pl.pallas_call(
        kern,
        out_shape=jax.ShapeDtypeStruct((m_pad, c_pad), out_dtype),
        grid=(m_pad // tm,),
        in_specs=in_specs,
        out_specs=pl.BlockSpec((tm, c_pad), lambda i: (i, 0)),
        compiler_params=pltpu.CompilerParams(
            dimension_semantics=("parallel",),
            vmem_limit_bytes=VMEM_LIMIT),
    )(*args)


# ----------------------------- JAX glue (im2col etc.) -----------------------------
def im2col_3x3(x_nhwc, stride):
    """pad=1, k=3 (PyTorch Conv2d semantics) -> bf16 (N*Ho*Wo, 9*C), K ordered (kh,kw,cin)."""
    N, H, W, C = x_nhwc.shape
    xp = jnp.pad(x_nhwc, ((0, 0), (1, 1), (1, 1), (0, 0)))
    Ho = (H + 2 - 3) // stride + 1
    Wo = (W + 2 - 3) // stride + 1
    cols = []
    for kh in range(3):
        for kw in range(3):
            cols.append(
                xp[:, kh: kh + stride * (Ho - 1) + 1: stride,
                      kw: kw + stride * (Wo - 1) + 1: stride, :])
    patches = jnp.stack(cols, axis=-2)                 # (N, Ho, Wo, 9, C) bf16
    return patches.reshape(N * Ho * Wo, 9 * C), Ho, Wo


def conv3x3_bn_stats(x_nhwc, w_torch, stride):
    """3x3 conv (PyTorch padding=1) with BN partial stats fused into the matmul."""
    patches, Ho, Wo = im2col_3x3(x_nhwc, stride)
    Cout = w_torch.shape[0]
    w_mat = jnp.transpose(w_torch, (2, 3, 1, 0)).reshape(-1, Cout).astype(jnp.bfloat16)
    out, psum, psq = pallas_matmul_bn(patches, w_mat)
    return out, psum, psq, patches.shape[0], Ho, Wo


def conv1x1_bn_stats(x_nhwc, w_torch, stride):
    """1x1 strided conv (PyTorch shortcut, no padding) with fused BN partial stats."""
    N, H, W, C = x_nhwc.shape
    xs = x_nhwc[:, ::stride, ::stride, :]
    Ho, Wo = xs.shape[1], xs.shape[2]
    Cout = w_torch.shape[0]
    w_mat = w_torch.reshape(Cout, C).T.astype(jnp.bfloat16)
    out, psum, psq = pallas_matmul_bn(xs.reshape(N * Ho * Wo, C), w_mat)
    return out, psum, psq, N * Ho * Wo, Ho, Wo


# ----------------------------- BasicBlock forward -----------------------------
def basic_block_forward(x_nchw, params, stride):
    """x_nchw: (N, Cin, H, W) float32, matching the PyTorch module's input layout."""
    N, Cin, H, W = x_nchw.shape
    Cout = params["w1"].shape[0]
    c_pad = _round_up(Cout, LANE)
    x = jnp.transpose(x_nchw, (0, 2, 3, 1)).astype(jnp.bfloat16)      # -> NHWC bf16

    # conv1 (+fused BN1 stats) -> normalize + relu  (intermediate kept in bf16)
    y1, s1, q1, M, Ho, Wo = conv3x3_bn_stats(x, params["w1"], stride)
    m_pad = y1.shape[0]
    sc1, sh1 = bn_scale_shift(s1, q1, params["g1"], params["b1"], M)
    a1 = pallas_bn_apply(y1, sc1, sh1, relu=True, out_dtype=jnp.bfloat16)

    # shortcut
    if stride != 1 or Cin != Cout:
        ys, ss, qs, _, _, _ = conv1x1_bn_stats(x, params["ws"], stride)
        scs, shs = bn_scale_shift(ss, qs, params["gs"], params["bs"], M)
        res = pallas_bn_apply(ys, scs, shs, relu=False, out_dtype=jnp.bfloat16)
    else:
        res = jnp.pad(x.reshape(M, Cin), ((0, m_pad - M), (0, c_pad - Cin)))

    # conv2 (+fused BN2 stats) -> normalize + residual add + relu fused in one pass
    a1_img = a1[:M, :Cout].reshape(N, Ho, Wo, Cout)   # slice fuses into the im2col fusion
    y2, s2, q2, _, _, _ = conv3x3_bn_stats(a1_img, params["w2"], 1)
    sc2, sh2 = bn_scale_shift(s2, q2, params["g2"], params["b2"], M)
    outp = pallas_bn_apply(y2, sc2, sh2, relu=True, residual=res,
                           out_dtype=jnp.float32)

    out = outp[:M, :Cout].reshape(N, Ho, Wo, Cout)
    return jnp.transpose(out, (0, 3, 1, 2))                           # back to NCHW f32


# ----------------------------- pure-JAX reference -----------------------------
def _ref_conv(x_nhwc, w_torch, stride, padding):
    # Operands cast to bf16 to mirror the MXU precision; accumulation stays f32.
    # Explicit padding matches PyTorch Conv2d semantics.
    w = jnp.transpose(w_torch, (2, 3, 1, 0)).astype(jnp.bfloat16)     # HWIO
    return lax.conv_general_dilated(
        x_nhwc.astype(jnp.bfloat16), w, window_strides=(stride, stride),
        padding=padding, dimension_numbers=("NHWC", "HWIO", "NHWC"),
        preferred_element_type=jnp.float32)


def _ref_bn(x_nhwc, gamma, beta):
    mean = jnp.mean(x_nhwc, axis=(0, 1, 2), keepdims=True)
    var = jnp.mean((x_nhwc - mean) ** 2, axis=(0, 1, 2), keepdims=True)
    return ((x_nhwc - mean) * lax.rsqrt(var + EPS) * gamma.reshape(1, 1, 1, -1)
            + beta.reshape(1, 1, 1, -1))


def ref_forward(x_nchw, params, stride):
    x = jnp.transpose(x_nchw, (0, 2, 3, 1)).astype(jnp.float32)
    out = jax.nn.relu(_ref_bn(_ref_conv(x, params["w1"], stride, [(1, 1), (1, 1)]),
                              params["g1"], params["b1"]))
    out = _ref_bn(_ref_conv(out, params["w2"], 1, [(1, 1), (1, 1)]),
                  params["g2"], params["b2"])
    if stride != 1 or params["w1"].shape[1] != params["w1"].shape[0]:
        sc = _ref_bn(_ref_conv(x, params["ws"], stride, [(0, 0), (0, 0)]),
                     params["gs"], params["bs"])
    else:
        sc = x
    return jnp.transpose(jax.nn.relu(out + sc), (0, 3, 1, 2))


# ----------------------------- main -----------------------------
if __name__ == "__main__":
    key = jax.random.PRNGKey(0)
    N, Cin, H, W = 2, 4, 16, 16
    Cout, stride = 8, 2   # exercises the conv1x1 + BN shortcut path

    k1, k2, k3, kx = jax.random.split(key, 4)
    params = {
        "w1": 0.1 * jax.random.normal(k1, (Cout, Cin, 3, 3), jnp.float32),
        "g1": jnp.ones((1, Cout), jnp.float32),
        "b1": jnp.zeros((1, Cout), jnp.float32),
        "w2": 0.1 * jax.random.normal(k2, (Cout, Cout, 3, 3), jnp.float32),
        "g2": jnp.ones((1, Cout), jnp.float32),
        "b2": jnp.zeros((1, Cout), jnp.float32),
        "ws": 0.1 * jax.random.normal(k3, (Cout, Cin, 1, 1), jnp.float32),
        "gs": jnp.ones((1, Cout), jnp.float32),
        "bs": jnp.zeros((1, Cout), jnp.float32),
    }
    x = jax.random.normal(kx, (N, Cin, H, W), jnp.float32)

    fwd = jax.jit(functools.partial(basic_block_forward, stride=stride))
    out = jax.block_until_ready(fwd(x, params))

    ref = jax.block_until_ready(ref_forward(x, params, stride))
    assert out.shape == (N, Cout, H // stride, W // stride)
    # Tolerance budget: bf16 MXU operands in both paths, plus bf16 storage of the
    # intermediate activations / residual on the Pallas path (reference keeps f32
    # intermediates, closer to PyTorch f32).  True error vs a full-f32 PyTorch run is
    # dominated by the bf16 MXU either way.
    np.testing.assert_allclose(np.asarray(out), np.asarray(ref), rtol=4e-2, atol=4e-2)

    print("KERNEL_OK")
</pallas_src>

<mosaic_0001>
module attributes {stable_mosaic.version = 11 : i64} {
  func.func @_matmul_bn_kernel(%arg0: i32, %arg1: i32, %arg2: i32, %arg3: memref<128x128xbf16, #tpu.memory_space<vmem>>, %arg4: memref<128x128xbf16, #tpu.memory_space<vmem>>, %arg5: memref<128x128xbf16, #tpu.memory_space<vmem>>, %arg6: memref<1x1x128xf32, #tpu.memory_space<vmem>>, %arg7: memref<1x1x128xf32, #tpu.memory_space<vmem>>, %arg8: memref<128x128xf32, #tpu.memory_space<vmem>>) attributes {dimension_semantics = [#tpu.dimension_semantics<parallel>, #tpu.dimension_semantics<parallel>, #tpu.dimension_semantics<arbitrary>], iteration_bounds = array<i64: 1, 1, 1>, scalar_prefetch = 0 : i64, scratch_operands = 1 : i64, tpu.core_type = #tpu.core_type<tc>, window_params = [{transform_indices = @transform_0, window_bounds = array<i64: 128, 128>}, {transform_indices = @transform_1, window_bounds = array<i64: 128, 128>}, {transform_indices = @transform_2, window_bounds = array<i64: 128, 128>}, {transform_indices = @transform_3, window_bounds = array<i64: 1, 1, 128>}, {transform_indices = @transform_4, window_bounds = array<i64: 1, 1, 128>}]} {
    %c0_i32 = arith.constant 0 : i32
    %0 = arith.cmpi eq, %arg2, %c0_i32 : i32
    %1 = arith.extui %0 : i1 to i32
    %c0_i32_0 = arith.constant 0 : i32
    %2 = arith.cmpi ne, %1, %c0_i32_0 : i32
    scf.if %2 {
      %cst_10 = arith.constant 0.000000e+00 : f32
      %12 = vector.broadcast %cst_10 : f32 to vector<128x128xf32>
      %c0_11 = arith.constant 0 : index
      %c0_12 = arith.constant 0 : index
      %13 = vector.load %arg8[%c0_11, %c0_12] : memref<128x128xf32, #tpu.memory_space<vmem>>, vector<128x128xf32>
      tpu.vector_store %arg8[%c0_11, %c0_12], %12 {strides = array<i32>} : memref<128x128xf32, #tpu.memory_space<vmem>>, vector<128x128xf32>,
    } else {
    }
    %c0 = arith.constant 0 : index
    %c0_1 = arith.constant 0 : index
    %3 = vector.load %arg8[%c0, %c0_1] : memref<128x128xf32, #tpu.memory_space<vmem>>, vector<128x128xf32>
    %c0_2 = arith.constant 0 : index
    %c0_3 = arith.constant 0 : index
    %4 = vector.load %arg3[%c0_2, %c0_3] : memref<128x128xbf16, #tpu.memory_space<vmem>>, vector<128x128xbf16>
    %c0_4 = arith.constant 0 : index
    %c0_5 = arith.constant 0 : index
    %5 = vector.load %arg4[%c0_4, %c0_5] : memref<128x128xbf16, #tpu.memory_space<vmem>>, vector<128x128xbf16>
    %cst = arith.constant dense<0.000000e+00> : vector<128x128xf32>
    %6 = tpu.matmul %4, %5, %cst {dimension_numbers = #tpu.dot_dimension_numbers<[1], [0], [0], [1], [0, 0, 1, 1], [], []>} : vector<128x128xbf16>, vector<128x128xbf16>, vector<128x128xf32> -> vector<128x128xf32>
    %7 = arith.addf %3, %6 : vector<128x128xf32>
    %c0_6 = arith.constant 0 : index
    %c0_7 = arith.constant 0 : index
    %8 = vector.load %arg8[%c0_6, %c0_7] : memref<128x128xf32, #tpu.memory_space<vmem>>, vector<128x128xf32>
    tpu.vector_store %arg8[%c0_6, %c0_7], %7 {strides = array<i32>} : memref<128x128xf32, #tpu.memory_space<vmem>>, vector<128x128xf32>,
    %c0_i32_8 = arith.constant 0 : i32
    %9 = arith.cmpi eq, %arg2, %c0_i32_8 : i32
    %10 = arith.extui %9 : i1 to i32
    %c0_i32_9 = arith.constant 0 : i32
    %11 = arith.cmpi ne, %10, %c0_i32_9 : i32
    scf.if %11 {
      %c0_10 = arith.constant 0 : index
      %c0_11 = arith.constant 0 : index
      %12 = vector.load %arg8[%c0_10, %c0_11] : memref<128x128xf32, #tpu.memory_space<vmem>>, vector<128x128xf32>
      %13 = arith.truncf %12 : vector<128x128xf32> to vector<128x128xbf16>
      %c0_12 = arith.constant 0 : index
      %c0_13 = arith.constant 0 : index
      %14 = vector.load %arg5[%c0_12, %c0_13] : memref<128x128xbf16, #tpu.memory_space<vmem>>, vector<128x128xbf16>
      tpu.vector_store %arg5[%c0_12, %c0_13], %13 {strides = array<i32>} : memref<128x128xbf16, #tpu.memory_space<vmem>>, vector<128x128xbf16>,
      %cst_14 = arith.constant dense<0.000000e+00> : vector<128xf32>
      %15 = vector.multi_reduction <add>, %12, %cst_14 [0] : vector<128x128xf32> to vector<128xf32>
      %16 = vector.shape_cast %15 : vector<128xf32> to vector<1x128xf32>
      %17 = vector.shape_cast %16 : vector<1x128xf32> to vector<1x1x128xf32>
      %c0_15 = arith.constant 0 : index
      %c0_16 = arith.constant 0 : index
      %c0_17 = arith.constant 0 : index
      %18 = vector.load %arg6[%c0_15, %c0_16, %c0_17] : memref<1x1x128xf32, #tpu.memory_space<vmem>>, vector<1x1x128xf32>
      tpu.vector_store %arg6[%c0_15, %c0_16, %c0_17], %17 {strides = array<i32>} : memref<1x1x128xf32, #tpu.memory_space<vmem>>, vector<1x1x128xf32>,
      %19 = arith.mulf %12, %12 : vector<128x128xf32>
      %cst_18 = arith.constant dense<0.000000e+00> : vector<128xf32>
      %20 = vector.multi_reduction <add>, %19, %cst_18 [0] : vector<128x128xf32> to vector<128xf32>
      %21 = vector.shape_cast %20 : vector<128xf32> to vector<1x128xf32>
      %22 = vector.shape_cast %21 : vector<1x128xf32> to vector<1x1x128xf32>
      %c0_19 = arith.constant 0 : index
      %c0_20 = arith.constant 0 : index
      %c0_21 = arith.constant 0 : index
      %23 = vector.load %arg7[%c0_19, %c0_20, %c0_21] : memref<1x1x128xf32, #tpu.memory_space<vmem>>, vector<1x1x128xf32>
      tpu.vector_store %arg7[%c0_19, %c0_20, %c0_21], %22 {strides = array<i32>} : memref<1x1x128xf32, #tpu.memory_space<vmem>>, vector<1x1x128xf32>,
    } else {
    }
    return
  }
  func.func @transform_0(%arg0: i32, %arg1: i32, %arg2: i32) -> (i32, i32) {
    %c0_i32 = arith.constant 0 : i32
    return %arg0, %arg2 : i32, i32
  }
  func.func @transform_1(%arg0: i32, %arg1: i32, %arg2: i32) -> (i32, i32) {
    %c0_i32 = arith.constant 0 : i32
    return %arg2, %arg1 : i32, i32
  }
  func.func @transform_2(%arg0: i32, %arg1: i32, %arg2: i32) -> (i32, i32) {
    %c0_i32 = arith.constant 0 : i32
    return %arg0, %arg1 : i32, i32
  }
  func.func @transform_3(%arg0: i32, %arg1: i32, %arg2: i32) -> (i32, i32, i32) {
    %c0_i32 = arith.constant 0 : i32
    %c0_i32_0 = arith.constant 0 : i32
    return %arg0, %c0_i32, %arg1 : i32, i32, i32
  }
  func.func @transform_4(%arg0: i32, %arg1: i32, %arg2: i32) -> (i32, i32, i32) {
    %c0_i32 = arith.constant 0 : i32
    %c0_i32_0 = arith.constant 0 : i32
    return %arg0, %c0_i32, %arg1 : i32, i32, i32
  }
}

module attributes {stable_mosaic.version = 11 : i64} {
  func.func @_bn_apply_kernel(%arg0: i32, %arg1: memref<128x128xbf16, #tpu.memory_space<vmem>>, %arg2: memref<1x128xf32, #tpu.memory_space<vmem>>, %arg3: memref<1x128xf32, #tpu.memory_space<vmem>>, %arg4: memref<128x128xbf16, #tpu.memory_space<vmem>>) attributes {dimension_semantics = [#tpu.dimension_semantics<parallel>], iteration_bounds = array<i64: 1>, scalar_prefetch = 0 : i64, scratch_operands = 0 : i64, tpu.core_type = #tpu.core_type<tc>, window_params = [{transform_indices = @transform_0, window_bounds = array<i64: 128, 128>}, {pipeline_mode = #tpu.pipeline_mode<synchronous>, transform_indices = @transform_1, window_bounds = array<i64: 1, 128>}, {pipeline_mode = #tpu.pipeline_mode<synchronous>, transform_indices = @transform_2, window_bounds = array<i64: 1, 128>}, {transform_indices = @transform_3, window_bounds = array<i64: 128, 128>}]} {
    %c0 = arith.constant 0 : index
    %c0_0 = arith.constant 0 : index
    %0 = vector.load %arg1[%c0, %c0_0] : memref<128x128xbf16, #tpu.memory_space<vmem>>, vector<128x128xbf16>
    %1 = arith.extf %0 : vector<128x128xbf16> to vector<128x128xf32>
    %c0_1 = arith.constant 0 : index
    %c0_2 = arith.constant 0 : index
    %2 = vector.load %arg2[%c0_1, %c0_2] : memref<1x128xf32, #tpu.memory_space<vmem>>, vector<1x128xf32>
    %3 = vector.broadcast %2 : vector<1x128xf32> to vector<128x128xf32>
    %4 = arith.mulf %1, %3 : vector<128x128xf32>
    %c0_3 = arith.constant 0 : index
    %c0_4 = arith.constant 0 : index
    %5 = vector.load %arg3[%c0_3, %c0_4] : memref<1x128xf32, #tpu.memory_space<vmem>>, vector<1x128xf32>
    %6 = vector.broadcast %5 : vector<1x128xf32> to vector<128x128xf32>
    %7 = arith.addf %4, %6 : vector<128x128xf32>
    %cst = arith.constant 0.000000e+00 : f32
    %8 = vector.broadcast %cst : f32 to vector<128x128xf32>
    %9 = arith.maximumf %7, %8 : vector<128x128xf32>
    %10 = arith.truncf %9 : vector<128x128xf32> to vector<128x128xbf16>
    %c0_5 = arith.constant 0 : index
    %c0_6 = arith.constant 0 : index
    %11 = vector.load %arg4[%c0_5, %c0_6] : memref<128x128xbf16, #tpu.memory_space<vmem>>, vector<128x128xbf16>
    tpu.vector_store %arg4[%c0_5, %c0_6], %10 {strides = array<i32>} : memref<128x128xbf16, #tpu.memory_space<vmem>>, vector<128x128xbf16>,
    return
  }
  func.func @transform_0(%arg0: i32) -> (i32, i32) {
    %c0_i32 = arith.constant 0 : i32
    %c0_i32_0 = arith.constant 0 : i32
    return %arg0, %c0_i32 : i32, i32
  }
  func.func @transform_1(%arg0: i32) -> (i32, i32) {
    %c0_i32 = arith.constant 0 : i32
    %c0_i32_0 = arith.constant 0 : i32
    %c0_i32_1 = arith.constant 0 : i32
    return %c0_i32, %c0_i32_0 : i32, i32
  }
  func.func @transform_2(%arg0: i32) -> (i32, i32) {
    %c0_i32 = arith.constant 0 : i32
    %c0_i32_0 = arith.constant 0 : i32
    %c0_i32_1 = arith.constant 0 : i32
    return %c0_i32, %c0_i32_0 : i32, i32
  }
  func.func @transform_3(%arg0: i32) -> (i32, i32) {
    %c0_i32 = arith.constant 0 : i32
    %c0_i32_0 = arith.constant 0 : i32
    return %arg0, %c0_i32 : i32, i32
  }
}

module attributes {stable_mosaic.version = 11 : i64} {
  func.func @_bn_apply_kernel(%arg0: i32, %arg1: memref<128x128xbf16, #tpu.memory_space<vmem>>, %arg2: memref<1x128xf32, #tpu.memory_space<vmem>>, %arg3: memref<1x128xf32, #tpu.memory_space<vmem>>, %arg4: memref<128x128xbf16, #tpu.memory_space<vmem>>) attributes {dimension_semantics = [#tpu.dimension_semantics<parallel>], iteration_bounds = array<i64: 1>, scalar_prefetch = 0 : i64, scratch_operands = 0 : i64, tpu.core_type = #tpu.core_type<tc>, window_params = [{transform_indices = @transform_0, window_bounds = array<i64: 128, 128>}, {pipeline_mode = #tpu.pipeline_mode<synchronous>, transform_indices = @transform_1, window_bounds = array<i64: 1, 128>}, {pipeline_mode = #tpu.pipeline_mode<synchronous>, transform_indices = @transform_2, window_bounds = array<i64: 1, 128>}, {transform_indices = @transform_3, window_bounds = array<i64: 128, 128>}]} {
    %c0 = arith.constant 0 : index
    %c0_0 = arith.constant 0 : index
    %0 = vector.load %arg1[%c0, %c0_0] : memref<128x128xbf16, #tpu.memory_space<vmem>>, vector<128x128xbf16>
    %1 = arith.extf %0 : vector<128x128xbf16> to vector<128x128xf32>
    %c0_1 = arith.constant 0 : index
    %c0_2 = arith.constant 0 : index
    %2 = vector.load %arg2[%c0_1, %c0_2] : memref<1x128xf32, #tpu.memory_space<vmem>>, vector<1x128xf32>
    %3 = vector.broadcast %2 : vector<1x128xf32> to vector<128x128xf32>
    %4 = arith.mulf %1, %3 : vector<128x128xf32>
    %c0_3 = arith.constant 0 : index
    %c0_4 = arith.constant 0 : index
    %5 = vector.load %arg3[%c0_3, %c0_4] : memref<1x128xf32, #tpu.memory_space<vmem>>, vector<1x128xf32>
    %6 = vector.broadcast %5 : vector<1x128xf32> to vector<128x128xf32>
    %7 = arith.addf %4, %6 : vector<128x128xf32>
    %8 = arith.truncf %7 : vector<128x128xf32> to vector<128x128xbf16>
    %c0_5 = arith.constant 0 : index
    %c0_6 = arith.constant 0 : index
    %9 = vector.load %arg4[%c0_5, %c0_6] : memref<128x128xbf16, #tpu.memory_space<vmem>>, vector<128x128xbf16>
    tpu.vector_store %arg4[%c0_5, %c0_6], %8 {strides = array<i32>} : memref<128x128xbf16, #tpu.memory_space<vmem>>, vector<128x128xbf16>,
    return
  }
  func.func @transform_0(%arg0: i32) -> (i32, i32) {
    %c0_i32 = arith.constant 0 : i32
    %c0_i32_0 = arith.constant 0 : i32
    return %arg0, %c0_i32 : i32, i32
  }
  func.func @transform_1(%arg0: i32) -> (i32, i32) {
    %c0_i32 = arith.constant 0 : i32
    %c0_i32_0 = arith.constant 0 : i32
    %c0_i32_1 = arith.constant 0 : i32
    return %c0_i32, %c0_i32_0 : i32, i32
  }
  func.func @transform_2(%arg0: i32) -> (i32, i32) {
    %c0_i32 = arith.constant 0 : i32
    %c0_i32_0 = arith.constant 0 : i32
    %c0_i32_1 = arith.constant 0 : i32
    return %c0_i32, %c0_i32_0 : i32, i32
  }
  func.func @transform_3(%arg0: i32) -> (i32, i32) {
    %c0_i32 = arith.constant 0 : i32
    %c0_i32_0 = arith.constant 0 : i32
    return %arg0, %c0_i32 : i32, i32
  }
}

module attributes {stable_mosaic.version = 11 : i64} {
  func.func @_bn_apply_kernel(%arg0: i32, %arg1: memref<128x128xbf16, #tpu.memory_space<vmem>>, %arg2: memref<1x128xf32, #tpu.memory_space<vmem>>, %arg3: memref<1x128xf32, #tpu.memory_space<vmem>>, %arg4: memref<128x128xbf16, #tpu.memory_space<vmem>>, %arg5: memref<128x128xf32, #tpu.memory_space<vmem>>) attributes {dimension_semantics = [#tpu.dimension_semantics<parallel>], iteration_bounds = array<i64: 1>, scalar_prefetch = 0 : i64, scratch_operands = 0 : i64, tpu.core_type = #tpu.core_type<tc>, window_params = [{transform_indices = @transform_0, window_bounds = array<i64: 128, 128>}, {pipeline_mode = #tpu.pipeline_mode<synchronous>, transform_indices = @transform_1, window_bounds = array<i64: 1, 128>}, {pipeline_mode = #tpu.pipeline_mode<synchronous>, transform_indices = @transform_2, window_bounds = array<i64: 1, 128>}, {transform_indices = @transform_3, window_bounds = array<i64: 128, 128>}, {transform_indices = @transform_4, window_bounds = array<i64: 128, 128>}]} {
    %c0 = arith.constant 0 : index
    %c0_0 = arith.constant 0 : index
    %0 = vector.load %arg1[%c0, %c0_0] : memref<128x128xbf16, #tpu.memory_space<vmem>>, vector<128x128xbf16>
    %1 = arith.extf %0 : vector<128x128xbf16> to vector<128x128xf32>
    %c0_1 = arith.constant 0 : index
    %c0_2 = arith.constant 0 : index
    %2 = vector.load %arg2[%c0_1, %c0_2] : memref<1x128xf32, #tpu.memory_space<vmem>>, vector<1x128xf32>
    %3 = vector.broadcast %2 : vector<1x128xf32> to vector<128x128xf32>
    %4 = arith.mulf %1, %3 : vector<128x128xf32>
    %c0_3 = arith.constant 0 : index
    %c0_4 = arith.constant 0 : index
    %5 = vector.load %arg3[%c0_3, %c0_4] : memref<1x128xf32, #tpu.memory_space<vmem>>, vector<1x128xf32>
    %6 = vector.broadcast %5 : vector<1x128xf32> to vector<128x128xf32>
    %7 = arith.addf %4, %6 : vector<128x128xf32>
    %c0_5 = arith.constant 0 : index
    %c0_6 = arith.constant 0 : index
    %8 = vector.load %arg4[%c0_5, %c0_6] : memref<128x128xbf16, #tpu.memory_space<vmem>>, vector<128x128xbf16>
    %9 = arith.extf %8 : vector<128x128xbf16> to vector<128x128xf32>
    %10 = arith.addf %7, %9 : vector<128x128xf32>
    %cst = arith.constant 0.000000e+00 : f32
    %11 = vector.broadcast %cst : f32 to vector<128x128xf32>
    %12 = arith.maximumf %10, %11 : vector<128x128xf32>
    %c0_7 = arith.constant 0 : index
    %c0_8 = arith.constant 0 : index
    %13 = vector.load %arg5[%c0_7, %c0_8] : memref<128x128xf32, #tpu.memory_space<vmem>>, vector<128x128xf32>
    tpu.vector_store %arg5[%c0_7, %c0_8], %12 {strides = array<i32>} : memref<128x128xf32, #tpu.memory_space<vmem>>, vector<128x128xf32>,
    return
  }
  func.func @transform_0(%arg0: i32) -> (i32, i32) {
    %c0_i32 = arith.constant 0 : i32
    %c0_i32_0 = arith.constant 0 : i32
    return %arg0, %c0_i32 : i32, i32
  }
  func.func @transform_1(%arg0: i32) -> (i32, i32) {
    %c0_i32 = arith.constant 0 : i32
    %c0_i32_0 = arith.constant 0 : i32
    %c0_i32_1 = arith.constant 0 : i32
    return %c0_i32, %c0_i32_0 : i32, i32
  }
  func.func @transform_2(%arg0: i32) -> (i32, i32) {
    %c0_i32 = arith.constant 0 : i32
    %c0_i32_0 = arith.constant 0 : i32
    %c0_i32_1 = arith.constant 0 : i32
    return %c0_i32, %c0_i32_0 : i32, i32
  }
  func.func @transform_3(%arg0: i32) -> (i32, i32) {
    %c0_i32 = arith.constant 0 : i32
    %c0_i32_0 = arith.constant 0 : i32
    return %arg0, %c0_i32 : i32, i32
  }
  func.func @transform_4(%arg0: i32) -> (i32, i32) {
    %c0_i32 = arith.constant 0 : i32
    %c0_i32_0 = arith.constant 0 : i32
    return %arg0, %c0_i32 : i32, i32
  }
}

</mosaic_0001>

<llo_original>
// kernel: basic_block_forward.7
$region0: #{basic_block_forward.7}
  #allocation0 [shape = 'u32[]', space=smem, size = 0x4, offset = 0x4, fixed_abs, tag = 'smem constant byte address 0x4 - core index']
  #allocation1 [shape = 'u32[144,128]{1,0:T(1,128)}', space=vmem, size = 0x12000, scoped, tag = 'internal scratch']
  %s0 = inlined_call_operand.vmem [shape: bf16[128,128], index: 0, kind: input, shape index: {}]
  %s1 = inlined_call_operand.vmem [shape: f32[1,128], index: 1, kind: input, shape index: {}]
  %s2 = inlined_call_operand.vmem [shape: f32[1,128], index: 2, kind: input, shape index: {}]
  %s3 = inlined_call_operand.vmem [shape: bf16[128,128], index: 3, kind: output, shape index: {}]
  %s4 = sld [smem:[#allocation0]]
  $region22: #{basic_block_forward.7} parent=0
    _
  %s6 = ssub.s32 1, %s4
  %s7 = scalar_select 0, %s6, %s4
  // Predicated region
  $region2: #{basic_block_forward.7} parent=0 // pred_check
    _
  $region3: #{basic_block_forward.7} parent=0 // pred_check_branch
    %9 = sbr.rel (0) target = $region5
  $region4: #{basic_block_forward.7} parent=0 // pred_region
    _
  $region5: #{basic_block_forward.7} parent=0 // pred_fallthru
    _
  // Predicated region
  $region6: #{basic_block_forward.7} parent=0 // pred_check
    _
  $region7: #{basic_block_forward.7} parent=0 // pred_check_branch
    %11 = sbr.rel (0) target = $region9
  $region8: #{basic_block_forward.7} parent=0 // pred_region
    _
  $region9: #{basic_block_forward.7} parent=0 // pred_fallthru
    _
  // Predicated region
  $region10: #{basic_block_forward.7} parent=0 // pred_check
    _
  $region11: #{basic_block_forward.7} parent=0 // pred_check_branch
    %13 = sbr.rel (0) target = $region13
  $region12: #{basic_block_forward.7} parent=0 // pred_region
    _
  $region13: #{basic_block_forward.7} parent=0 // pred_fallthru
    _
  %v14 = vld [vmem:[%s0] sm:$0xf]
  %v15 = vld [vmem:[%s0 + $0x4] sm:$0xf]
  %v16 = vld [vmem:[%s0 + $0x8] sm:$0xf]
  %v17 = vld [vmem:[%s0 + $0xc] sm:$0xf]
  %v18 = vld [vmem:[%s0 + $0x10] sm:$0xf]
  %v19 = vld [vmem:[%s0 + $0x14] sm:$0xf]
  %v20 = vld [vmem:[%s0 + $0x18] sm:$0xf]
  %v21 = vld [vmem:[%s0 + $0x1c] sm:$0xf]
  %v22 = vld [vmem:[%s0 + $0x20] sm:$0xf]
  %v23 = vld [vmem:[%s0 + $0x24] sm:$0xf]
  %v24 = vld [vmem:[%s0 + $0x28] sm:$0xf]
  %v25 = vld [vmem:[%s0 + $0x2c] sm:$0xf]
  %v26 = vld [vmem:[%s0 + $0x30] sm:$0xf]
  %v27 = vld [vmem:[%s0 + $0x34] sm:$0xf]
  %v28 = vld [vmem:[%s0 + $0x38] sm:$0xf]
  %v29 = vld [vmem:[%s0 + $0x3c] sm:$0xf]
  %v30 = vunpack.c.l.bf16 %v14
  %v31 = vunpack.c.l.bf16 %v15
  %v32 = vunpack.c.l.bf16 %v16
  %v33 = vunpack.c.l.bf16 %v17
  %v34 = vunpack.c.l.bf16 %v18
  %v35 = vunpack.c.l.bf16 %v19
  %v36 = vunpack.c.l.bf16 %v20
  %v37 = vunpack.c.l.bf16 %v21
  %v38 = vunpack.c.l.bf16 %v22
  %v39 = vunpack.c.l.bf16 %v23
  %v40 = vunpack.c.l.bf16 %v24
  %v41 = vunpack.c.l.bf16 %v25
  %v42 = vunpack.c.l.bf16 %v26
  %v43 = vunpack.c.l.bf16 %v27
  %v44 = vunpack.c.l.bf16 %v28
  %v45 = vunpack.c.l.bf16 %v29
  %v46 = vld [vmem:[%s1] sm:$0x1]
  %v48 = vlaneseq
  %v49 = vshrl.u32 %v48, 7
  %v50 = vsub.s32 0, %v49
  %v51 = vrot.slane %v46, %v50
  %v53 = vmul.f32 %v30, %v51
  %v54 = vmul.f32 %v31, %v51
  %v55 = vmul.f32 %v32, %v51
  %v56 = vmul.f32 %v33, %v51
  %v57 = vmul.f32 %v34, %v51
  %v58 = vmul.f32 %v35, %v51
  %v59 = vmul.f32 %v36, %v51
  %v60 = vmul.f32 %v37, %v51
  %v61 = vmul.f32 %v38, %v51
  %v62 = vmul.f32 %v39, %v51
  %v63 = vmul.f32 %v40, %v51
  %v64 = vmul.f32 %v41, %v51
  %v65 = vmul.f32 %v42, %v51
  %v66 = vmul.f32 %v43, %v51
  %v67 = vmul.f32 %v44, %v51
  %v68 = vmul.f32 %v45, %v51
  %v69 = vld [vmem:[%s2] sm:$0x1]
  %v71 = vlaneseq
  %v72 = vshrl.u32 %v71, 7
  %v73 = vsub.s32 0, %v72
  %v74 = vrot.slane %v69, %v73
  %v76 = vadd.f32 %v53, %v74
  %v77 = vadd.f32 %v54, %v74
  %v78 = vadd.f32 %v55, %v74
  %v79 = vadd.f32 %v56, %v74
  %v80 = vadd.f32 %v57, %v74
  %v81 = vadd.f32 %v58, %v74
  %v82 = vadd.f32 %v59, %v74
  %v83 = vadd.f32 %v60, %v74
  %v84 = vadd.f32 %v61, %v74
  %v85 = vadd.f32 %v62, %v74
  %v86 = vadd.f32 %v63, %v74
  %v87 = vadd.f32 %v64, %v74
  %v88 = vadd.f32 %v65, %v74
  %v89 = vadd.f32 %v66, %v74
  %v90 = vadd.f32 %v67, %v74
  %v91 = vadd.f32 %v68, %v74
  %v92 = vmax.f32 %v76, 0.0
  %v93 = vmax.f32 %v77, 0.0
  %v94 = vmax.f32 %v78, 0.0
  %v95 = vmax.f32 %v79, 0.0
  %v96 = vmax.f32 %v80, 0.0
  %v97 = vmax.f32 %v81, 0.0
  %v98 = vmax.f32 %v82, 0.0
  %v99 = vmax.f32 %v83, 0.0
  %v100 = vmax.f32 %v84, 0.0
  %v101 = vmax.f32 %v85, 0.0
  %v102 = vmax.f32 %v86, 0.0
  %v103 = vmax.f32 %v87, 0.0
  %v104 = vmax.f32 %v88, 0.0
  %v105 = vmax.f32 %v89, 0.0
  %v106 = vmax.f32 %v90, 0.0
  %v107 = vmax.f32 %v91, 0.0
  %v108 = vpack.c.bf16 %v93, %v92
  %v109 = vpack.c.bf16 %v95, %v94
  %v110 = vpack.c.bf16 %v97, %v96
  %v111 = vpack.c.bf16 %v99, %v98
  %v112 = vpack.c.bf16 %v101, %v100
  %v113 = vpack.c.bf16 %v103, %v102
  %v114 = vpack.c.bf16 %v105, %v104
  %v115 = vpack.c.bf16 %v107, %v106
  %v124 = vunpack.c.l.b16 %v108
  %v125 = vunpack.c.h.b16 %v108
  %v126 = vunpack.c.l.b16 %v109
  %v127 = vunpack.c.h.b16 %v109
  %v128 = vunpack.c.l.b16 %v110
  %v129 = vunpack.c.h.b16 %v110
  %v130 = vunpack.c.l.b16 %v111
  %v131 = vunpack.c.h.b16 %v111
  %v132 = vunpack.c.l.b16 %v112
  %v133 = vunpack.c.h.b16 %v112
  %v134 = vunpack.c.l.b16 %v113
  %v135 = vunpack.c.h.b16 %v113
  %v136 = vunpack.c.l.b16 %v114
  %v137 = vunpack.c.h.b16 %v114
  %v138 = vunpack.c.l.b16 %v115
  %v139 = vunpack.c.h.b16 %v115
  %v140 = vpack.c.b16 %v124, %v124
  %v141 = vpack.c.b16 %v125, %v125
  %v142 = vpack.c.b16 %v126, %v126
  %v143 = vpack.c.b16 %v127, %v127
  %v144 = vpack.c.b16 %v128, %v128
  %v145 = vpack.c.b16 %v129, %v129
  %v146 = vpack.c.b16 %v130, %v130
  %v147 = vpack.c.b16 %v131, %v131
  %v148 = vpack.c.b16 %v132, %v132
  %v149 = vpack.c.b16 %v133, %v133
  %v150 = vpack.c.b16 %v134, %v134
  %v151 = vpack.c.b16 %v135, %v135
  %v152 = vpack.c.b16 %v136, %v136
  %v153 = vpack.c.b16 %v137, %v137
  %v154 = vpack.c.b16 %v138, %v138
  %v155 = vpack.c.b16 %v139, %v139
  %172 = vst [vmem:[%s3] sm:$0xf] %v140
  %173 = vst [vmem:[%s3 + $0x4] sm:$0xf] %v141
  %174 = vst [vmem:[%s3 + $0x8] sm:$0xf] %v142
  %175 = vst [vmem:[%s3 + $0xc] sm:$0xf] %v143
  %176 = vst [vmem:[%s3 + $0x10] sm:$0xf] %v144
  %177 = vst [vmem:[%s3 + $0x14] sm:$0xf] %v145
  %178 = vst [vmem:[%s3 + $0x18] sm:$0xf] %v146
  %179 = vst [vmem:[%s3 + $0x1c] sm:$0xf] %v147
  %180 = vst [vmem:[%s3 + $0x20] sm:$0xf] %v148
  %181 = vst [vmem:[%s3 + $0x24] sm:$0xf] %v149
  %182 = vst [vmem:[%s3 + $0x28] sm:$0xf] %v150
  %183 = vst [vmem:[%s3 + $0x2c] sm:$0xf] %v151
  %184 = vst [vmem:[%s3 + $0x30] sm:$0xf] %v152
  %185 = vst [vmem:[%s3 + $0x34] sm:$0xf] %v153
  %186 = vst [vmem:[%s3 + $0x38] sm:$0xf] %v154
  %187 = vst [vmem:[%s3 + $0x3c] sm:$0xf] %v155
  // Predicated region
  $region14: #{basic_block_forward.7} parent=0 // pred_check
    _
  $region15: #{basic_block_forward.7} parent=0 // pred_check_branch
    %189 = sbr.rel (0) target = $region17
  $region16: #{basic_block_forward.7} parent=0 // pred_region
    _
  $region17: #{basic_block_forward.7} parent=0 // pred_fallthru
    _
  // Predicated region
  $region18: #{basic_block_forward.7} parent=0 // pred_check
    _
  $region19: #{basic_block_forward.7} parent=0 // pred_check_branch
    %191 = sbr.rel (0) target = $region21
  $region20: #{basic_block_forward.7} parent=0 // pred_region
    _
  $region21: #{basic_block_forward.7} parent=0 // pred_fallthru
    _

// kernel: basic_block_forward.6
$region0: #{basic_block_forward.6}
  #allocation0 [shape = 'u32[]', space=smem, size = 0x4, offset = 0x4, fixed_abs, tag = 'smem constant byte address 0x4 - core index']
  #allocation1 [shape = 'u32[144,128]{1,0:T(1,128)}', space=vmem, size = 0x12000, scoped, tag = 'internal scratch']
  #allocation2 [shape = 'f32[128,128]{1,0:T(8,128)}', space=vmem, size = 0x10000, scoped, tag = 'scratch operand']
  %s0 = inlined_call_operand.vmem [shape: bf16[128,128], index: 0, kind: input, shape index: {}]
  %s1 = inlined_call_operand.vmem [shape: bf16[128,128], index: 1, kind: input, shape index: {}]
  %s2 = inlined_call_operand.vmem [shape: bf16[128,128], index: 2, kind: output, shape index: {0}]
  %s3 = inlined_call_operand.vmem [shape: f32[1,1,128], index: 3, kind: output, shape index: {1}]
  %s4 = inlined_call_operand.vmem [shape: f32[1,1,128], index: 4, kind: output, shape index: {2}]
  %5 = xla_tuple %s2, %s3, %s4
  %s6 = sld [smem:[#allocation0]]
  $region42: #{basic_block_forward.6} parent=0
    _
  %s8 = ssub.s32 1, %s6
  %s9 = scalar_select 0, %s8, %s6
  // Predicated region
  $region2: #{basic_block_forward.6} parent=0 // pred_check
    _
  $region3: #{basic_block_forward.6} parent=0 // pred_check_branch
    %11 = sbr.rel (0) target = $region5
  $region4: #{basic_block_forward.6} parent=0 // pred_region
    _
  $region5: #{basic_block_forward.6} parent=0 // pred_fallthru
    _
  // Predicated region
  $region6: #{basic_block_forward.6} parent=0 // pred_check
    _
  $region7: #{basic_block_forward.6} parent=0 // pred_check_branch
    %13 = sbr.rel (0) target = $region9
  $region8: #{basic_block_forward.6} parent=0 // pred_region
    _
  $region9: #{basic_block_forward.6} parent=0 // pred_fallthru
    _
  %p15 = scmp.eq.s32.totalorder 0, 0
  // Predicated region
  $region10: #{basic_block_forward.6} parent=0 // pred_check
    %p16 = pneg %p15
  $region11: #{basic_block_forward.6} parent=0 // pred_check_branch
    %18 = sbr.rel (%p16) target = $region13
  $region12: #{basic_block_forward.6} parent=0 // pred_region
    %19 = vst [vmem:[#allocation2] sm:$0xff] 0.0
    %20 = vst [vmem:[#allocation2 + $0x8] sm:$0xff] 0.0
    %21 = vst [vmem:[#allocation2 + $0x10] sm:$0xff] 0.0
    %22 = vst [vmem:[#allocation2 + $0x18] sm:$0xff] 0.0
    %23 = vst [vmem:[#allocation2 + $0x20] sm:$0xff] 0.0
    %24 = vst [vmem:[#allocation2 + $0x28] sm:$0xff] 0.0
    %25 = vst [vmem:[#allocation2 + $0x30] sm:$0xff] 0.0
    %26 = vst [vmem:[#allocation2 + $0x38] sm:$0xff] 0.0
    %27 = vst [vmem:[#allocation2 + $0x40] sm:$0xff] 0.0
    %28 = vst [vmem:[#allocation2 + $0x48] sm:$0xff] 0.0
    %29 = vst [vmem:[#allocation2 + $0x50] sm:$0xff] 0.0
    %30 = vst [vmem:[#allocation2 + $0x58] sm:$0xff] 0.0
    %31 = vst [vmem:[#allocation2 + $0x60] sm:$0xff] 0.0
    %32 = vst [vmem:[#allocation2 + $0x68] sm:$0xff] 0.0
    %33 = vst [vmem:[#allocation2 + $0x70] sm:$0xff] 0.0
    %34 = vst [vmem:[#allocation2 + $0x78] sm:$0xff] 0.0
  $region13: #{basic_block_forward.6} parent=0 // pred_fallthru
    _
  %v35 = vld [vmem:[#allocation2] sm:$0xff]
  %v36 = vld [vmem:[#allocation2 + $0x8] sm:$0xff]
  %v37 = vld [vmem:[#allocation2 + $0x10] sm:$0xff]
  %v38 = vld [vmem:[#allocation2 + $0x18] sm:$0xff]
  %v39 = vld [vmem:[#allocation2 + $0x20] sm:$0xff]
  %v40 = vld [vmem:[#allocation2 + $0x28] sm:$0xff]
  %v41 = vld [vmem:[#allocation2 + $0x30] sm:$0xff]
  %v42 = vld [vmem:[#allocation2 + $0x38] sm:$0xff]
  %v43 = vld [vmem:[#allocation2 + $0x40] sm:$0xff]
  %v44 = vld [vmem:[#allocation2 + $0x48] sm:$0xff]
  %v45 = vld [vmem:[#allocation2 + $0x50] sm:$0xff]
  %v46 = vld [vmem:[#allocation2 + $0x58] sm:$0xff]
  %v47 = vld [vmem:[#allocation2 + $0x60] sm:$0xff]
  %v48 = vld [vmem:[#allocation2 + $0x68] sm:$0xff]
  %v49 = vld [vmem:[#allocation2 + $0x70] sm:$0xff]
  %v50 = vld [vmem:[#allocation2 + $0x78] sm:$0xff]
  %v51 = vld [vmem:[%s0] sm:$0xf]
  %v52 = vld [vmem:[%s0 + $0x4] sm:$0xf]
  %v53 = vld [vmem:[%s0 + $0x8] sm:$0xf]
  %v54 = vld [vmem:[%s0 + $0xc] sm:$0xf]
  %v55 = vld [vmem:[%s0 + $0x10] sm:$0xf]
  %v56 = vld [vmem:[%s0 + $0x14] sm:$0xf]
  %v57 = vld [vmem:[%s0 + $0x18] sm:$0xf]
  %v58 = vld [vmem:[%s0 + $0x1c] sm:$0xf]
  %v59 = vld [vmem:[%s0 + $0x20] sm:$0xf]
  %v60 = vld [vmem:[%s0 + $0x24] sm:$0xf]
  %v61 = vld [vmem:[%s0 + $0x28] sm:$0xf]
  %v62 = vld [vmem:[%s0 + $0x2c] sm:$0xf]
  %v63 = vld [vmem:[%s0 + $0x30] sm:$0xf]
  %v64 = vld [vmem:[%s0 + $0x34] sm:$0xf]
  %v65 = vld [vmem:[%s0 + $0x38] sm:$0xf]
  %v66 = vld [vmem:[%s0 + $0x3c] sm:$0xf]
  %v67 = vld [vmem:[%s1] sm:$0xf]
  %v68 = vld [vmem:[%s1 + $0x4] sm:$0xf]
  %v69 = vld [vmem:[%s1 + $0x8] sm:$0xf]
  %v70 = vld [vmem:[%s1 + $0xc] sm:$0xf]
  %v71 = vld [vmem:[%s1 + $0x10] sm:$0xf]
  %v72 = vld [vmem:[%s1 + $0x14] sm:$0xf]
  %v73 = vld [vmem:[%s1 + $0x18] sm:$0xf]
  %v74 = vld [vmem:[%s1 + $0x1c] sm:$0xf]
  %v75 = vld [vmem:[%s1 + $0x20] sm:$0xf]
  %v76 = vld [vmem:[%s1 + $0x24] sm:$0xf]
  %v77 = vld [vmem:[%s1 + $0x28] sm:$0xf]
  %v78 = vld [vmem:[%s1 + $0x2c] sm:$0xf]
  %v79 = vld [vmem:[%s1 + $0x30] sm:$0xf]
  %v80 = vld [vmem:[%s1 + $0x34] sm:$0xf]
  %v81 = vld [vmem:[%s1 + $0x38] sm:$0xf]
  %v82 = vld [vmem:[%s1 + $0x3c] sm:$0xf]
  %v99 = vunpack.c.l.b16 %v51
  %v100 = vunpack.c.l.b16 %v52
  %v101 = vunpack.c.l.b16 %v53
  %v102 = vunpack.c.l.b16 %v54
  %v103 = vunpack.c.l.b16 %v55
  %v104 = vunpack.c.l.b16 %v56
  %v105 = vunpack.c.l.b16 %v57
  %v106 = vunpack.c.l.b16 %v58
  %v107 = vunpack.c.l.b16 %v59
  %v108 = vunpack.c.l.b16 %v60
  %v109 = vunpack.c.l.b16 %v61
  %v110 = vunpack.c.l.b16 %v62
  %v111 = vunpack.c.l.b16 %v63
  %v112 = vunpack.c.l.b16 %v64
  %v113 = vunpack.c.l.b16 %v65
  %v114 = vunpack.c.l.b16 %v66
  %v115 = vpack.c.b16 %v100, %v99
  %v116 = vpack.c.b16 %v102, %v101
  %v117 = vpack.c.b16 %v104, %v103
  %v118 = vpack.c.b16 %v106, %v105
  %v119 = vpack.c.b16 %v108, %v107
  %v120 = vpack.c.b16 %v110, %v109
  %v121 = vpack.c.b16 %v112, %v111
  %v122 = vpack.c.b16 %v114, %v113
  %v147 = vunpack.c.l.b16 %v67
  %v148 = vunpack.c.l.b16 %v68
  %v149 = vunpack.c.l.b16 %v69
  %v150 = vunpack.c.l.b16 %v70
  %v151 = vunpack.c.l.b16 %v71
  %v152 = vunpack.c.l.b16 %v72
  %v153 = vunpack.c.l.b16 %v73
  %v154 = vunpack.c.l.b16 %v74
  %v155 = vunpack.c.l.b16 %v75
  %v156 = vunpack.c.l.b16 %v76
  %v157 = vunpack.c.l.b16 %v77
  %v158 = vunpack.c.l.b16 %v78
  %v159 = vunpack.c.l.b16 %v79
  %v160 = vunpack.c.l.b16 %v80
  %v161 = vunpack.c.l.b16 %v81
  %v162 = vunpack.c.l.b16 %v82
  %v163 = vpack.c.b16 %v148, %v147
  %v164 = vpack.c.b16 %v150, %v149
  %v165 = vpack.c.b16 %v152, %v151
  %v166 = vpack.c.b16 %v154, %v153
  %v167 = vpack.c.b16 %v156, %v155
  %v168 = vpack.c.b16 %v158, %v157
  %v169 = vpack.c.b16 %v160, %v159
  %v170 = vpack.c.b16 %v162, %v161
  %179 = vmatprep.subr.bf16.mxu0 0
  %180 = vmatpush1.bf16.msra.mxu0 %v163
  %181 = vmatprep.subr.bf16.mxu0 0
  %182 = vmatpush1.bf16.msra.mxu0 %v164
  %183 = vmatprep.subr.bf16.mxu0 0
  %184 = vmatpush1.bf16.msra.mxu0 %v165
  %185 = vmatprep.subr.bf16.mxu0 0
  %186 = vmatpush1.bf16.msra.mxu0 %v166
  %187 = vmatprep.subr.bf16.mxu0 0
  %188 = vmatpush1.bf16.msra.mxu0 %v167
  %189 = vmatprep.subr.bf16.mxu0 0
  %190 = vmatpush1.bf16.msra.mxu0 %v168
  %191 = vmatprep.subr.bf16.mxu0 0
  %192 = vmatpush1.bf16.msra.mxu0 %v169
  %193 = vmatprep.subr.bf16.mxu0 0
  %194 = vmatpush1.bf16.msra.mxu0 %v170
  %195 = vmatprep.subr.bf16.mxu0 0
  %196 = vmatpush1.bf16.msra.mxu0 0
  %197 = vmatprep.subr.bf16.mxu0 0
  %198 = vmatpush1.bf16.msra.mxu0 0
  %199 = vmatprep.subr.bf16.mxu0 0
  %200 = vmatpush1.bf16.msra.mxu0 0
  %201 = vmatprep.subr.bf16.mxu0 0
  %202 = vmatpush1.bf16.msra.mxu0 0
  %203 = vmatprep.subr.bf16.mxu0 0
  %204 = vmatpush1.bf16.msra.mxu0 0
  %205 = vmatprep.subr.bf16.mxu0 0
  %206 = vmatpush1.bf16.msra.mxu0 0
  %207 = vmatprep.subr.bf16.mxu0 0
  %208 = vmatpush1.bf16.msra.mxu0 0
  %209 = vmatprep.subr.bf16.mxu0 0
  %210 = vmatpush1.bf16.msra.mxu0 0
  %211 = vmatprep.mubr.bf16.mxu0 0
  %212 = vmatmul.mubr.bf16.gmra.mrb[0].mxu0 %v115
  %v213 = vpop.f32.mrb[0].mxu0
  %v214 = vadd.f32 0.0, %v213
  %v215 = vpop.f32.mrb[0].mxu0
  %v216 = vpop.f32.mrb[0].mxu0
  %v217 = vadd.f32 0.0, %v216
  %v218 = vpop.f32.mrb[0].mxu0
  %219 = vmatprep.mubr.bf16.mxu0 0
  %220 = vmatmul.mubr.bf16.gmra.mrb[0].mxu0 %v116
  %v221 = vpop.f32.mrb[0].mxu0
  %v222 = vadd.f32 0.0, %v221
  %v223 = vpop.f32.mrb[0].mxu0
  %v224 = vpop.f32.mrb[0].mxu0
  %v225 = vadd.f32 0.0, %v224
  %v226 = vpop.f32.mrb[0].mxu0
  %227 = vmatprep.mubr.bf16.mxu0 0
  %228 = vmatmul.mubr.bf16.gmra.mrb[0].mxu0 %v117
  %v229 = vpop.f32.mrb[0].mxu0
  %v230 = vadd.f32 0.0, %v229
  %v231 = vpop.f32.mrb[0].mxu0
  %v232 = vpop.f32.mrb[0].mxu0
  %v233 = vadd.f32 0.0, %v232
  %v234 = vpop.f32.mrb[0].mxu0
  %235 = vmatprep.mubr.bf16.mxu0 0
  %236 = vmatmul.mubr.bf16.gmra.mrb[0].mxu0 %v118
  %v237 = vpop.f32.mrb[0].mxu0
  %v238 = vadd.f32 0.0, %v237
  %v239 = vpop.f32.mrb[0].mxu0
  %v240 = vpop.f32.mrb[0].mxu0
  %v241 = vadd.f32 0.0, %v240
  %v242 = vpop.f32.mrb[0].mxu0
  %243 = vmatprep.mubr.bf16.mxu0 0
  %244 = vmatmul.mubr.bf16.gmra.mrb[0].mxu0 %v119
  %v245 = vpop.f32.mrb[0].mxu0
  %v246 = vadd.f32 0.0, %v245
  %v247 = vpop.f32.mrb[0].mxu0
  %v248 = vpop.f32.mrb[0].mxu0
  %v249 = vadd.f32 0.0, %v248
  %v250 = vpop.f32.mrb[0].mxu0
  %251 = vmatprep.mubr.bf16.mxu0 0
  %252 = vmatmul.mubr.bf16.gmra.mrb[0].mxu0 %v120
  %v253 = vpop.f32.mrb[0].mxu0
  %v254 = vadd.f32 0.0, %v253
  %v255 = vpop.f32.mrb[0].mxu0
  %v256 = vpop.f32.mrb[0].mxu0
  %v257 = vadd.f32 0.0, %v256
  %v258 = vpop.f32.mrb[0].mxu0
  %259 = vmatprep.mubr.bf16.mxu0 0
  %260 = vmatmul.mubr.bf16.gmra.mrb[0].mxu0 %v121
  %v261 = vpop.f32.mrb[0].mxu0
  %v262 = vadd.f32 0.0, %v261
  %v263 = vpop.f32.mrb[0].mxu0
  %v264 = vpop.f32.mrb[0].mxu0
  %v265 = vadd.f32 0.0, %v264
  %v266 = vpop.f32.mrb[0].mxu0
  %267 = vmatprep.mubr.bf16.mxu0 0
  %268 = vmatmul.mubr.bf16.gmra.mrb[0].mxu0 %v122
  %v269 = vpop.f32.mrb[0].mxu0
  %v270 = vadd.f32 0.0, %v269
  %v271 = vpop.f32.mrb[0].mxu0
  %v272 = vpop.f32.mrb[0].mxu0
  %v273 = vadd.f32 0.0, %v272
  %v274 = vpop.f32.mrb[0].mxu0
  %275 = vdwg.mxu0
  %v276 = vadd.f32 %v35, %v214
  %v277 = vadd.f32 %v36, %v217
  %v278 = vadd.f32 %v37, %v222
  %v279 = vadd.f32 %v38, %v225
  %v280 = vadd.f32 %v39, %v230
  %v281 = vadd.f32 %v40, %v233
  %v282 = vadd.f32 %v41, %v238
  %v283 = vadd.f32 %v42, %v241
  %v284 = vadd.f32 %v43, %v246
  %v285 = vadd.f32 %v44, %v249
  %v286 = vadd.f32 %v45, %v254
  %v287 = vadd.f32 %v46, %v257
  %v288 = vadd.f32 %v47, %v262
  %v289 = vadd.f32 %v48, %v265
  %v290 = vadd.f32 %v49, %v270
  %v291 = vadd.f32 %v50, %v273
  %292 = vst [vmem:[#allocation2] sm:$0xff] %v276
  %293 = vst [vmem:[#allocation2 + $0x8] sm:$0xff] %v277
  %294 = vst [vmem:[#allocation2 + $0x10] sm:$0xff] %v278
  %295 = vst [vmem:[#allocation2 + $0x18] sm:$0xff] %v279
  %296 = vst [vmem:[#allocation2 + $0x20] sm:$0xff] %v280
  %297 = vst [vmem:[#allocation2 + $0x28] sm:$0xff] %v281
  %298 = vst [vmem:[#allocation2 + $0x30] sm:$0xff] %v282
  %299 = vst [vmem:[#allocation2 + $0x38] sm:$0xff] %v283
  %300 = vst [vmem:[#allocation2 + $0x40] sm:$0xff] %v284
  %301 = vst [vmem:[#allocation2 + $0x48] sm:$0xff] %v285
  %302 = vst [vmem:[#allocation2 + $0x50] sm:$0xff] %v286
  %303 = vst [vmem:[#allocation2 + $0x58] sm:$0xff] %v287
  %304 = vst [vmem:[#allocation2 + $0x60] sm:$0xff] %v288
  %305 = vst [vmem:[#allocation2 + $0x68] sm:$0xff] %v289
  %306 = vst [vmem:[#allocation2 + $0x70] sm:$0xff] %v290
  %307 = vst [vmem:[#allocation2 + $0x78] sm:$0xff] %v291
  // Predicated region
  $region14: #{basic_block_forward.6} parent=0 // pred_check
    %p308 = pneg %p15
  $region15: #{basic_block_forward.6} parent=0 // pred_check_branch
    %310 = sbr.rel (%p308) target = $region17
  $region16: #{basic_block_forward.6} parent=0 // pred_region
    %v311 = vld [vmem:[#allocation2] sm:$0xff]
    %v312 = vld [vmem:[#allocation2 + $0x8] sm:$0xff]
    %v313 = vld [vmem:[#allocation2 + $0x10] sm:$0xff]
    %v314 = vld [vmem:[#allocation2 + $0x18] sm:$0xff]
    %v315 = vld [vmem:[#allocation2 + $0x20] sm:$0xff]
    %v316 = vld [vmem:[#allocation2 + $0x28] sm:$0xff]
    %v317 = vld [vmem:[#allocation2 + $0x30] sm:$0xff]
    %v318 = vld [vmem:[#allocation2 + $0x38] sm:$0xff]
    %v319 = vld [vmem:[#allocation2 + $0x40] sm:$0xff]
    %v320 = vld [vmem:[#allocation2 + $0x48] sm:$0xff]
    %v321 = vld [vmem:[#allocation2 + $0x50] sm:$0xff]
    %v322 = vld [vmem:[#allocation2 + $0x58] sm:$0xff]
    %v323 = vld [vmem:[#allocation2 + $0x60] sm:$0xff]
    %v324 = vld [vmem:[#allocation2 + $0x68] sm:$0xff]
    %v325 = vld [vmem:[#allocation2 + $0x70] sm:$0xff]
    %v326 = vld [vmem:[#allocation2 + $0x78] sm:$0xff]
    %v327 = vpack.c.bf16 %v312, %v311
    %v328 = vpack.c.bf16 %v314, %v313
    %v329 = vpack.c.bf16 %v316, %v315
    %v330 = vpack.c.bf16 %v318, %v317
    %v331 = vpack.c.bf16 %v320, %v319
    %v332 = vpack.c.bf16 %v322, %v321
    %v333 = vpack.c.bf16 %v324, %v323
    %v334 = vpack.c.bf16 %v326, %v325
    %v343 = vunpack.c.l.b16 %v327
    %v344 = vunpack.c.h.b16 %v327
    %v345 = vunpack.c.l.b16 %v328
    %v346 = vunpack.c.h.b16 %v328
    %v347 = vunpack.c.l.b16 %v329
    %v348 = vunpack.c.h.b16 %v329
    %v349 = vunpack.c.l.b16 %v330
    %v350 = vunpack.c.h.b16 %v330
    %v351 = vunpack.c.l.b16 %v331
    %v352 = vunpack.c.h.b16 %v331
    %v353 = vunpack.c.l.b16 %v332
    %v354 = vunpack.c.h.b16 %v332
    %v355 = vunpack.c.l.b16 %v333
    %v356 = vunpack.c.h.b16 %v333
    %v357 = vunpack.c.l.b16 %v334
    %v358 = vunpack.c.h.b16 %v334
    %v359 = vpack.c.b16 %v343, %v343
    %v360 = vpack.c.b16 %v344, %v344
    %v361 = vpack.c.b16 %v345, %v345
    %v362 = vpack.c.b16 %v346, %v346
    %v363 = vpack.c.b16 %v347, %v347
    %v364 = vpack.c.b16 %v348, %v348
    %v365 = vpack.c.b16 %v349, %v349
    %v366 = vpack.c.b16 %v350, %v350
    %v367 = vpack.c.b16 %v351, %v351
    %v368 = vpack.c.b16 %v352, %v352
    %v369 = vpack.c.b16 %v353, %v353
    %v370 = vpack.c.b16 %v354, %v354
    %v371 = vpack.c.b16 %v355, %v355
    %v372 = vpack.c.b16 %v356, %v356
    %v373 = vpack.c.b16 %v357, %v357
    %v374 = vpack.c.b16 %v358, %v358
    %391 = vst [vmem:[%s2] sm:$0xf] %v359
    %392 = vst [vmem:[%s2 + $0x4] sm:$0xf] %v360
    %393 = vst [vmem:[%s2 + $0x8] sm:$0xf] %v361
    %394 = vst [vmem:[%s2 + $0xc] sm:$0xf] %v362
    %395 = vst [vmem:[%s2 + $0x10] sm:$0xf] %v363
    %396 = vst [vmem:[%s2 + $0x14] sm:$0xf] %v364
    %397 = vst [vmem:[%s2 + $0x18] sm:$0xf] %v365
    %398 = vst [vmem:[%s2 + $0x1c] sm:$0xf] %v366
    %399 = vst [vmem:[%s2 + $0x20] sm:$0xf] %v367
    %400 = vst [vmem:[%s2 + $0x24] sm:$0xf] %v368
    %401 = vst [vmem:[%s2 + $0x28] sm:$0xf] %v369
    %402 = vst [vmem:[%s2 + $0x2c] sm:$0xf] %v370
    %403 = vst [vmem:[%s2 + $0x30] sm:$0xf] %v371
    %404 = vst [vmem:[%s2 + $0x34] sm:$0xf] %v372
    %405 = vst [vmem:[%s2 + $0x38] sm:$0xf] %v373
    %406 = vst [vmem:[%s2 + $0x3c] sm:$0xf] %v374
    %v407 = vadd.f32 %v311, %v312
    %v408 = vadd.f32 %v407, %v313
    %v409 = vadd.f32 %v408, %v314
    %v410 = vadd.f32 %v409, %v315
    %v411 = vadd.f32 %v410, %v316
    %v412 = vadd.f32 %v411, %v317
    %v413 = vadd.f32 %v412, %v318
    %v414 = vadd.f32 %v413, %v319
    %v415 = vadd.f32 %v414, %v320
    %v416 = vadd.f32 %v415, %v321
    %v417 = vadd.f32 %v416, %v322
    %v418 = vadd.f32 %v417, %v323
    %v419 = vadd.f32 %v418, %v324
    %v420 = vadd.f32 %v419, %v325
    %v421 = vadd.f32 %v420, %v326
    %v422 = vrot.slane %v421, 4
    %v423 = vadd.f32 %v421, %v422
    %v424 = vrot.slane %v423, 2
    %v425 = vadd.f32 %v423, %v424
    %v426 = vrot.slane %v425, 1
    %v427 = vadd.f32 %v425, %v426
    %428 = vst [vmem:[%s3] sm:$0x1] %v427
    %v429 = vmul.f32 %v311, %v311
    %v430 = vmul.f32 %v312, %v312
    %v431 = vmul.f32 %v313, %v313
    %v432 = vmul.f32 %v314, %v314
    %v433 = vmul.f32 %v315, %v315
    %v434 = vmul.f32 %v316, %v316
    %v435 = vmul.f32 %v317, %v317
    %v436 = vmul.f32 %v318, %v318
    %v437 = vmul.f32 %v319, %v319
    %v438 = vmul.f32 %v320, %v320
    %v439 = vmul.f32 %v321, %v321
    %v440 = vmul.f32 %v322, %v322
    %v441 = vmul.f32 %v323, %v323
    %v442 = vmul.f32 %v324, %v324
    %v443 = vmul.f32 %v325, %v325
    %v444 = vmul.f32 %v326, %v326
    %v445 = vadd.f32 %v429, %v430
    %v446 = vadd.f32 %v445, %v431
    %v447 = vadd.f32 %v446, %v432
    %v448 = vadd.f32 %v447, %v433
    %v449 = vadd.f32 %v448, %v434
    %v450 = vadd.f32 %v449, %v435
    %v451 = vadd.f32 %v450, %v436
    %v452 = vadd.f32 %v451, %v437
    %v453 = vadd.f32 %v452, %v438
    %v454 = vadd.f32 %v453, %v439
    %v455 = vadd.f32 %v454, %v440
    %v456 = vadd.f32 %v455, %v441
    %v457 = vadd.f32 %v456, %v442
    %v458 = vadd.f32 %v457, %v443
    %v459 = vadd.f32 %v458, %v444
    %v460 = vrot.slane %v459, 4
    %v461 = vadd.f32 %v459, %v460
    %v462 = vrot.slane %v461, 2
    %v463 = vadd.f32 %v461, %v462
    %v464 = vrot.slane %v463, 1
    %v465 = vadd.f32 %v463, %v464
    %466 = vst [vmem:[%s4] sm:$0x1] %v465
  $region17: #{basic_block_forward.6} parent=0 // pred_fallthru
    _
  // Predicated region
  $region18: #{basic_block_forward.6} parent=0 // pred_check
    _
  $region19: #{basic_block_forward.6} parent=0 // pred_check_branch
    %468 = sbr.rel (0) target = $region21
  $region20: #{basic_block_forward.6} parent=0 // pred_region
    _
  $region21: #{basic_block_forward.6} parent=0 // pred_fallthru
    _
  // Predicated region
  $region22: #{basic_block_forward.6} parent=0 // pred_check
    _
  $region23: #{basic_block_forward.6} parent=0 // pred_check_branch
    %470 = sbr.rel (0) target = $region25
  $region24: #{basic_block_forward.6} parent=0 // pred_region
    _
  $region25: #{basic_block_forward.6} parent=0 // pred_fallthru
    _
  // Predicated region
  $region26: #{basic_block_forward.6} parent=0 // pred_check
    _
  $region27: #{basic_block_forward.6} parent=0 // pred_check_branch
    %472 = sbr.rel (0) target = $region29
  $region28: #{basic_block_forward.6} parent=0 // pred_region
    _
  $region29: #{basic_block_forward.6} parent=0 // pred_fallthru
    _
  // Predicated region
  $region30: #{basic_block_forward.6} parent=0 // pred_check
    _
  $region31: #{basic_block_forward.6} parent=0 // pred_check_branch
    %474 = sbr.rel (0) target = $region33
  $region32: #{basic_block_forward.6} parent=0 // pred_region
    _
  $region33: #{basic_block_forward.6} parent=0 // pred_fallthru
    _
  // Predicated region
  $region34: #{basic_block_forward.6} parent=0 // pred_check
    _
  $region35: #{basic_block_forward.6} parent=0 // pred_check_branch
    %476 = sbr.rel (0) target = $region37
  $region36: #{basic_block_forward.6} parent=0 // pred_region
    _
  $region37: #{basic_block_forward.6} parent=0 // pred_fallthru
    _
  // Predicated region
  $region38: #{basic_block_forward.6} parent=0 // pred_check
    _
  $region39: #{basic_block_forward.6} parent=0 // pred_check_branch
    %478 = sbr.rel (0) target = $region41
  $region40: #{basic_block_forward.6} parent=0 // pred_region
    _
  $region41: #{basic_block_forward.6} parent=0 // pred_fallthru
    _

// kernel: basic_block_forward.9
$region0: #{basic_block_forward.9}
  #allocation0 [shape = 'u32[]', space=smem, size = 0x4, offset = 0x4, fixed_abs, tag = 'smem constant byte address 0x4 - core index']
  #allocation1 [shape = 'u32[144,128]{1,0:T(1,128)}', space=vmem, size = 0x12000, scoped, tag = 'internal scratch']
  %s0 = inlined_call_operand.vmem [shape: bf16[128,128], index: 0, kind: input, shape index: {}]
  %s1 = inlined_call_operand.vmem [shape: f32[1,128], index: 1, kind: input, shape index: {}]
  %s2 = inlined_call_operand.vmem [shape: f32[1,128], index: 2, kind: input, shape index: {}]
  %s3 = inlined_call_operand.vmem [shape: bf16[128,128], index: 3, kind: output, shape index: {}]
  %s4 = sld [smem:[#allocation0]]
  $region22: #{basic_block_forward.9} parent=0
    _
  %s6 = ssub.s32 1, %s4
  %s7 = scalar_select 0, %s6, %s4
  // Predicated region
  $region2: #{basic_block_forward.9} parent=0 // pred_check
    _
  $region3: #{basic_block_forward.9} parent=0 // pred_check_branch
    %9 = sbr.rel (0) target = $region5
  $region4: #{basic_block_forward.9} parent=0 // pred_region
    _
  $region5: #{basic_block_forward.9} parent=0 // pred_fallthru
    _
  // Predicated region
  $region6: #{basic_block_forward.9} parent=0 // pred_check
    _
  $region7: #{basic_block_forward.9} parent=0 // pred_check_branch
    %11 = sbr.rel (0) target = $region9
  $region8: #{basic_block_forward.9} parent=0 // pred_region
    _
  $region9: #{basic_block_forward.9} parent=0 // pred_fallthru
    _
  // Predicated region
  $region10: #{basic_block_forward.9} parent=0 // pred_check
    _
  $region11: #{basic_block_forward.9} parent=0 // pred_check_branch
    %13 = sbr.rel (0) target = $region13
  $region12: #{basic_block_forward.9} parent=0 // pred_region
    _
  $region13: #{basic_block_forward.9} parent=0 // pred_fallthru
    _
  %v14 = vld [vmem:[%s0] sm:$0xf]
  %v15 = vld [vmem:[%s0 + $0x4] sm:$0xf]
  %v16 = vld [vmem:[%s0 + $0x8] sm:$0xf]
  %v17 = vld [vmem:[%s0 + $0xc] sm:$0xf]
  %v18 = vld [vmem:[%s0 + $0x10] sm:$0xf]
  %v19 = vld [vmem:[%s0 + $0x14] sm:$0xf]
  %v20 = vld [vmem:[%s0 + $0x18] sm:$0xf]
  %v21 = vld [vmem:[%s0 + $0x1c] sm:$0xf]
  %v22 = vld [vmem:[%s0 + $0x20] sm:$0xf]
  %v23 = vld [vmem:[%s0 + $0x24] sm:$0xf]
  %v24 = vld [vmem:[%s0 + $0x28] sm:$0xf]
  %v25 = vld [vmem:[%s0 + $0x2c] sm:$0xf]
  %v26 = vld [vmem:[%s0 + $0x30] sm:$0xf]
  %v27 = vld [vmem:[%s0 + $0x34] sm:$0xf]
  %v28 = vld [vmem:[%s0 + $0x38] sm:$0xf]
  %v29 = vld [vmem:[%s0 + $0x3c] sm:$0xf]
  %v30 = vunpack.c.l.bf16 %v14
  %v31 = vunpack.c.l.bf16 %v15
  %v32 = vunpack.c.l.bf16 %v16
  %v33 = vunpack.c.l.bf16 %v17
  %v34 = vunpack.c.l.bf16 %v18
  %v35 = vunpack.c.l.bf16 %v19
  %v36 = vunpack.c.l.bf16 %v20
  %v37 = vunpack.c.l.bf16 %v21
  %v38 = vunpack.c.l.bf16 %v22
  %v39 = vunpack.c.l.bf16 %v23
  %v40 = vunpack.c.l.bf16 %v24
  %v41 = vunpack.c.l.bf16 %v25
  %v42 = vunpack.c.l.bf16 %v26
  %v43 = vunpack.c.l.bf16 %v27
  %v44 = vunpack.c.l.bf16 %v28
  %v45 = vunpack.c.l.bf16 %v29
  %v46 = vld [vmem:[%s1] sm:$0x1]
  %v48 = vlaneseq
  %v49 = vshrl.u32 %v48, 7
  %v50 = vsub.s32 0, %v49
  %v51 = vrot.slane %v46, %v50
  %v53 = vmul.f32 %v30, %v51
  %v54 = vmul.f32 %v31, %v51
  %v55 = vmul.f32 %v32, %v51
  %v56 = vmul.f32 %v33, %v51
  %v57 = vmul.f32 %v34, %v51
  %v58 = vmul.f32 %v35, %v51
  %v59 = vmul.f32 %v36, %v51
  %v60 = vmul.f32 %v37, %v51
  %v61 = vmul.f32 %v38, %v51
  %v62 = vmul.f32 %v39, %v51
  %v63 = vmul.f32 %v40, %v51
  %v64 = vmul.f32 %v41, %v51
  %v65 = vmul.f32 %v42, %v51
  %v66 = vmul.f32 %v43, %v51
  %v67 = vmul.f32 %v44, %v51
  %v68 = vmul.f32 %v45, %v51
  %v69 = vld [vmem:[%s2] sm:$0x1]
  %v71 = vlaneseq
  %v72 = vshrl.u32 %v71, 7
  %v73 = vsub.s32 0, %v72
  %v74 = vrot.slane %v69, %v73
  %v76 = vadd.f32 %v53, %v74
  %v77 = vadd.f32 %v54, %v74
  %v78 = vadd.f32 %v55, %v74
  %v79 = vadd.f32 %v56, %v74
  %v80 = vadd.f32 %v57, %v74
  %v81 = vadd.f32 %v58, %v74
  %v82 = vadd.f32 %v59, %v74
  %v83 = vadd.f32 %v60, %v74
  %v84 = vadd.f32 %v61, %v74
  %v85 = vadd.f32 %v62, %v74
  %v86 = vadd.f32 %v63, %v74
  %v87 = vadd.f32 %v64, %v74
  %v88 = vadd.f32 %v65, %v74
  %v89 = vadd.f32 %v66, %v74
  %v90 = vadd.f32 %v67, %v74
  %v91 = vadd.f32 %v68, %v74
  %v92 = vpack.c.bf16 %v77, %v76
  %v93 = vpack.c.bf16 %v79, %v78
  %v94 = vpack.c.bf16 %v81, %v80
  %v95 = vpack.c.bf16 %v83, %v82
  %v96 = vpack.c.bf16 %v85, %v84
  %v97 = vpack.c.bf16 %v87, %v86
  %v98 = vpack.c.bf16 %v89, %v88
  %v99 = vpack.c.bf16 %v91, %v90
  %v108 = vunpack.c.l.b16 %v92
  %v109 = vunpack.c.h.b16 %v92
  %v110 = vunpack.c.l.b16 %v93
  %v111 = vunpack.c.h.b16 %v93
  %v112 = vunpack.c.l.b16 %v94
  %v113 = vunpack.c.h.b16 %v94
  %v114 = vunpack.c.l.b16 %v95
  %v115 = vunpack.c.h.b16 %v95
  %v116 = vunpack.c.l.b16 %v96
  %v117 = vunpack.c.h.b16 %v96
  %v118 = vunpack.c.l.b16 %v97
  %v119 = vunpack.c.h.b16 %v97
  %v120 = vunpack.c.l.b16 %v98
  %v121 = vunpack.c.h.b16 %v98
  %v122 = vunpack.c.l.b16 %v99
  %v123 = vunpack.c.h.b16 %v99
  %v124 = vpack.c.b16 %v108, %v108
  %v125 = vpack.c.b16 %v109, %v109
  %v126 = vpack.c.b16 %v110, %v110
  %v127 = vpack.c.b16 %v111, %v111
  %v128 = vpack.c.b16 %v112, %v112
  %v129 = vpack.c.b16 %v113, %v113
  %v130 = vpack.c.b16 %v114, %v114
  %v131 = vpack.c.b16 %v115, %v115
  %v132 = vpack.c.b16 %v116, %v116
  %v133 = vpack.c.b16 %v117, %v117
  %v134 = vpack.c.b16 %v118, %v118
  %v135 = vpack.c.b16 %v119, %v119
  %v136 = vpack.c.b16 %v120, %v120
  %v137 = vpack.c.b16 %v121, %v121
  %v138 = vpack.c.b16 %v122, %v122
  %v139 = vpack.c.b16 %v123, %v123
  %156 = vst [vmem:[%s3] sm:$0xf] %v124
  %157 = vst [vmem:[%s3 + $0x4] sm:$0xf] %v125
  %158 = vst [vmem:[%s3 + $0x8] sm:$0xf] %v126
  %159 = vst [vmem:[%s3 + $0xc] sm:$0xf] %v127
  %160 = vst [vmem:[%s3 + $0x10] sm:$0xf] %v128
  %161 = vst [vmem:[%s3 + $0x14] sm:$0xf] %v129
  %162 = vst [vmem:[%s3 + $0x18] sm:$0xf] %v130
  %163 = vst [vmem:[%s3 + $0x1c] sm:$0xf] %v131
  %164 = vst [vmem:[%s3 + $0x20] sm:$0xf] %v132
  %165 = vst [vmem:[%s3 + $0x24] sm:$0xf] %v133
  %166 = vst [vmem:[%s3 + $0x28] sm:$0xf] %v134
  %167 = vst [vmem:[%s3 + $0x2c] sm:$0xf] %v135
  %168 = vst [vmem:[%s3 + $0x30] sm:$0xf] %v136
  %169 = vst [vmem:[%s3 + $0x34] sm:$0xf] %v137
  %170 = vst [vmem:[%s3 + $0x38] sm:$0xf] %v138
  %171 = vst [vmem:[%s3 + $0x3c] sm:$0xf] %v139
  // Predicated region
  $region14: #{basic_block_forward.9} parent=0 // pred_check
    _
  $region15: #{basic_block_forward.9} parent=0 // pred_check_branch
    %173 = sbr.rel (0) target = $region17
  $region16: #{basic_block_forward.9} parent=0 // pred_region
    _
  $region17: #{basic_block_forward.9} parent=0 // pred_fallthru
    _
  // Predicated region
  $region18: #{basic_block_forward.9} parent=0 // pred_check
    _
  $region19: #{basic_block_forward.9} parent=0 // pred_check_branch
    %175 = sbr.rel (0) target = $region21
  $region20: #{basic_block_forward.9} parent=0 // pred_region
    _
  $region21: #{basic_block_forward.9} parent=0 // pred_fallthru
    _

// kernel: basic_block_forward.11
$region0: #{basic_block_forward.11}
  #allocation0 [shape = 'u32[]', space=smem, size = 0x4, offset = 0x4, fixed_abs, tag = 'smem constant byte address 0x4 - core index']
  #allocation1 [shape = 'u32[144,128]{1,0:T(1,128)}', space=vmem, size = 0x12000, scoped, tag = 'internal scratch']
  %s0 = inlined_call_operand.vmem [shape: bf16[128,128], index: 0, kind: input, shape index: {}]
  %s1 = inlined_call_operand.vmem [shape: f32[1,128], index: 1, kind: input, shape index: {}]
  %s2 = inlined_call_operand.vmem [shape: f32[1,128], index: 2, kind: input, shape index: {}]
  %s3 = inlined_call_operand.vmem [shape: bf16[128,128], index: 3, kind: input, shape index: {}]
  %s4 = inlined_call_operand.vmem [shape: f32[128,128], index: 4, kind: output, shape index: {}]
  %s5 = sld [smem:[#allocation0]]
  $region26: #{basic_block_forward.11} parent=0
    _
  %s7 = ssub.s32 1, %s5
  %s8 = scalar_select 0, %s7, %s5
  // Predicated region
  $region2: #{basic_block_forward.11} parent=0 // pred_check
    _
  $region3: #{basic_block_forward.11} parent=0 // pred_check_branch
    %10 = sbr.rel (0) target = $region5
  $region4: #{basic_block_forward.11} parent=0 // pred_region
    _
  $region5: #{basic_block_forward.11} parent=0 // pred_fallthru
    _
  // Predicated region
  $region6: #{basic_block_forward.11} parent=0 // pred_check
    _
  $region7: #{basic_block_forward.11} parent=0 // pred_check_branch
    %12 = sbr.rel (0) target = $region9
  $region8: #{basic_block_forward.11} parent=0 // pred_region
    _
  $region9: #{basic_block_forward.11} parent=0 // pred_fallthru
    _
  // Predicated region
  $region10: #{basic_block_forward.11} parent=0 // pred_check
    _
  $region11: #{basic_block_forward.11} parent=0 // pred_check_branch
    %14 = sbr.rel (0) target = $region13
  $region12: #{basic_block_forward.11} parent=0 // pred_region
    _
  $region13: #{basic_block_forward.11} parent=0 // pred_fallthru
    _
  // Predicated region
  $region14: #{basic_block_forward.11} parent=0 // pred_check
    _
  $region15: #{basic_block_forward.11} parent=0 // pred_check_branch
    %16 = sbr.rel (0) target = $region17
  $region16: #{basic_block_forward.11} parent=0 // pred_region
    _
  $region17: #{basic_block_forward.11} parent=0 // pred_fallthru
    _
  %v17 = vld [vmem:[%s0] sm:$0xf]
  %v18 = vld [vmem:[%s0 + $0x4] sm:$0xf]
  %v19 = vld [vmem:[%s0 + $0x8] sm:$0xf]
  %v20 = vld [vmem:[%s0 + $0xc] sm:$0xf]
  %v21 = vld [vmem:[%s0 + $0x10] sm:$0xf]
  %v22 = vld [vmem:[%s0 + $0x14] sm:$0xf]
  %v23 = vld [vmem:[%s0 + $0x18] sm:$0xf]
  %v24 = vld [vmem:[%s0 + $0x1c] sm:$0xf]
  %v25 = vld [vmem:[%s0 + $0x20] sm:$0xf]
  %v26 = vld [vmem:[%s0 + $0x24] sm:$0xf]
  %v27 = vld [vmem:[%s0 + $0x28] sm:$0xf]
  %v28 = vld [vmem:[%s0 + $0x2c] sm:$0xf]
  %v29 = vld [vmem:[%s0 + $0x30] sm:$0xf]
  %v30 = vld [vmem:[%s0 + $0x34] sm:$0xf]
  %v31 = vld [vmem:[%s0 + $0x38] sm:$0xf]
  %v32 = vld [vmem:[%s0 + $0x3c] sm:$0xf]
  %v33 = vunpack.c.l.bf16 %v17
  %v34 = vunpack.c.l.bf16 %v18
  %v35 = vunpack.c.l.bf16 %v19
  %v36 = vunpack.c.l.bf16 %v20
  %v37 = vunpack.c.l.bf16 %v21
  %v38 = vunpack.c.l.bf16 %v22
  %v39 = vunpack.c.l.bf16 %v23
  %v40 = vunpack.c.l.bf16 %v24
  %v41 = vunpack.c.l.bf16 %v25
  %v42 = vunpack.c.l.bf16 %v26
  %v43 = vunpack.c.l.bf16 %v27
  %v44 = vunpack.c.l.bf16 %v28
  %v45 = vunpack.c.l.bf16 %v29
  %v46 = vunpack.c.l.bf16 %v30
  %v47 = vunpack.c.l.bf16 %v31
  %v48 = vunpack.c.l.bf16 %v32
  %v49 = vld [vmem:[%s1] sm:$0x1]
  %v51 = vlaneseq
  %v52 = vshrl.u32 %v51, 7
  %v53 = vsub.s32 0, %v52
  %v54 = vrot.slane %v49, %v53
  %v56 = vmul.f32 %v33, %v54
  %v57 = vmul.f32 %v34, %v54
  %v58 = vmul.f32 %v35, %v54
  %v59 = vmul.f32 %v36, %v54
  %v60 = vmul.f32 %v37, %v54
  %v61 = vmul.f32 %v38, %v54
  %v62 = vmul.f32 %v39, %v54
  %v63 = vmul.f32 %v40, %v54
  %v64 = vmul.f32 %v41, %v54
  %v65 = vmul.f32 %v42, %v54
  %v66 = vmul.f32 %v43, %v54
  %v67 = vmul.f32 %v44, %v54
  %v68 = vmul.f32 %v45, %v54
  %v69 = vmul.f32 %v46, %v54
  %v70 = vmul.f32 %v47, %v54
  %v71 = vmul.f32 %v48, %v54
  %v72 = vld [vmem:[%s2] sm:$0x1]
  %v74 = vlaneseq
  %v75 = vshrl.u32 %v74, 7
  %v76 = vsub.s32 0, %v75
  %v77 = vrot.slane %v72, %v76
  %v79 = vadd.f32 %v56, %v77
  %v80 = vadd.f32 %v57, %v77
  %v81 = vadd.f32 %v58, %v77
  %v82 = vadd.f32 %v59, %v77
  %v83 = vadd.f32 %v60, %v77
  %v84 = vadd.f32 %v61, %v77
  %v85 = vadd.f32 %v62, %v77
  %v86 = vadd.f32 %v63, %v77
  %v87 = vadd.f32 %v64, %v77
  %v88 = vadd.f32 %v65, %v77
  %v89 = vadd.f32 %v66, %v77
  %v90 = vadd.f32 %v67, %v77
  %v91 = vadd.f32 %v68, %v77
  %v92 = vadd.f32 %v69, %v77
  %v93 = vadd.f32 %v70, %v77
  %v94 = vadd.f32 %v71, %v77
  %v95 = vld [vmem:[%s3] sm:$0xf]
  %v96 = vld [vmem:[%s3 + $0x4] sm:$0xf]
  %v97 = vld [vmem:[%s3 + $0x8] sm:$0xf]
  %v98 = vld [vmem:[%s3 + $0xc] sm:$0xf]
  %v99 = vld [vmem:[%s3 + $0x10] sm:$0xf]
  %v100 = vld [vmem:[%s3 + $0x14] sm:$0xf]
  %v101 = vld [vmem:[%s3 + $0x18] sm:$0xf]
  %v102 = vld [vmem:[%s3 + $0x1c] sm:$0xf]
  %v103 = vld [vmem:[%s3 + $0x20] sm:$0xf]
  %v104 = vld [vmem:[%s3 + $0x24] sm:$0xf]
  %v105 = vld [vmem:[%s3 + $0x28] sm:$0xf]
  %v106 = vld [vmem:[%s3 + $0x2c] sm:$0xf]
  %v107 = vld [vmem:[%s3 + $0x30] sm:$0xf]
  %v108 = vld [vmem:[%s3 + $0x34] sm:$0xf]
  %v109 = vld [vmem:[%s3 + $0x38] sm:$0xf]
  %v110 = vld [vmem:[%s3 + $0x3c] sm:$0xf]
  %v111 = vunpack.c.l.bf16 %v95
  %v112 = vunpack.c.l.bf16 %v96
  %v113 = vunpack.c.l.bf16 %v97
  %v114 = vunpack.c.l.bf16 %v98
  %v115 = vunpack.c.l.bf16 %v99
  %v116 = vunpack.c.l.bf16 %v100
  %v117 = vunpack.c.l.bf16 %v101
  %v118 = vunpack.c.l.bf16 %v102
  %v119 = vunpack.c.l.bf16 %v103
  %v120 = vunpack.c.l.bf16 %v104
  %v121 = vunpack.c.l.bf16 %v105
  %v122 = vunpack.c.l.bf16 %v106
  %v123 = vunpack.c.l.bf16 %v107
  %v124 = vunpack.c.l.bf16 %v108
  %v125 = vunpack.c.l.bf16 %v109
  %v126 = vunpack.c.l.bf16 %v110
  %v127 = vadd.f32 %v79, %v111
  %v128 = vadd.f32 %v80, %v112
  %v129 = vadd.f32 %v81, %v113
  %v130 = vadd.f32 %v82, %v114
  %v131 = vadd.f32 %v83, %v115
  %v132 = vadd.f32 %v84, %v116
  %v133 = vadd.f32 %v85, %v117
  %v134 = vadd.f32 %v86, %v118
  %v135 = vadd.f32 %v87, %v119
  %v136 = vadd.f32 %v88, %v120
  %v137 = vadd.f32 %v89, %v121
  %v138 = vadd.f32 %v90, %v122
  %v139 = vadd.f32 %v91, %v123
  %v140 = vadd.f32 %v92, %v124
  %v141 = vadd.f32 %v93, %v125
  %v142 = vadd.f32 %v94, %v126
  %v143 = vmax.f32 %v127, 0.0
  %v144 = vmax.f32 %v128, 0.0
  %v145 = vmax.f32 %v129, 0.0
  %v146 = vmax.f32 %v130, 0.0
  %v147 = vmax.f32 %v131, 0.0
  %v148 = vmax.f32 %v132, 0.0
  %v149 = vmax.f32 %v133, 0.0
  %v150 = vmax.f32 %v134, 0.0
  %v151 = vmax.f32 %v135, 0.0
  %v152 = vmax.f32 %v136, 0.0
  %v153 = vmax.f32 %v137, 0.0
  %v154 = vmax.f32 %v138, 0.0
  %v155 = vmax.f32 %v139, 0.0
  %v156 = vmax.f32 %v140, 0.0
  %v157 = vmax.f32 %v141, 0.0
  %v158 = vmax.f32 %v142, 0.0
  %159 = vst [vmem:[%s4] sm:$0xff] %v143
  %160 = vst [vmem:[%s4 + $0x8] sm:$0xff] %v144
  %161 = vst [vmem:[%s4 + $0x10] sm:$0xff] %v145
  %162 = vst [vmem:[%s4 + $0x18] sm:$0xff] %v146
  %163 = vst [vmem:[%s4 + $0x20] sm:$0xff] %v147
  %164 = vst [vmem:[%s4 + $0x28] sm:$0xff] %v148
  %165 = vst [vmem:[%s4 + $0x30] sm:$0xff] %v149
  %166 = vst [vmem:[%s4 + $0x38] sm:$0xff] %v150
  %167 = vst [vmem:[%s4 + $0x40] sm:$0xff] %v151
  %168 = vst [vmem:[%s4 + $0x48] sm:$0xff] %v152
  %169 = vst [vmem:[%s4 + $0x50] sm:$0xff] %v153
  %170 = vst [vmem:[%s4 + $0x58] sm:$0xff] %v154
  %171 = vst [vmem:[%s4 + $0x60] sm:$0xff] %v155
  %172 = vst [vmem:[%s4 + $0x68] sm:$0xff] %v156
  %173 = vst [vmem:[%s4 + $0x70] sm:$0xff] %v157
  %174 = vst [vmem:[%s4 + $0x78] sm:$0xff] %v158
  // Predicated region
  $region18: #{basic_block_forward.11} parent=0 // pred_check
    _
  $region19: #{basic_block_forward.11} parent=0 // pred_check_branch
    %176 = sbr.rel (0) target = $region21
  $region20: #{basic_block_forward.11} parent=0 // pred_region
    _
  $region21: #{basic_block_forward.11} parent=0 // pred_fallthru
    _
  // Predicated region
  $region22: #{basic_block_forward.11} parent=0 // pred_check
    _
  $region23: #{basic_block_forward.11} parent=0 // pred_check_branch
    %178 = sbr.rel (0) target = $region25
  $region24: #{basic_block_forward.11} parent=0 // pred_region
    _
  $region25: #{basic_block_forward.11} parent=0 // pred_fallthru
    _

</llo_original>
